<compile_context>
chip_gen: v6e
topology: v6e:2x2x1
jax: 0.10.0
libtpu: 0.0.40
codegen_flags: <defaults>
</compile_context>

<pallas_src>
import functools

import jax
import jax.numpy as jnp
from jax.experimental import pallas as pl
from jax.experimental.pallas import tpu as pltpu

LANE = 128


def _round_up(x, m):
    return (x + m - 1) // m * m


def _pick_tile(n, target):
    """Largest multiple of 128 <= min(n, target) that divides n (n % 128 == 0)."""
    t = min(n, max(LANE, target))
    t = (t // LANE) * LANE
    while t > LANE and n % t != 0:
        t -= LANE
    return t


# ---------------------------------------------------------------------------
# Stage 1:  XW = x @ W   (hoisted out of the adjacency reduction, node-tiled)
# ---------------------------------------------------------------------------
def xw_kernel(x_ref, w_ref, o_ref):
    o_ref[...] = jnp.dot(
        x_ref[...], w_ref[...], preferred_element_type=jnp.float32
    ).astype(o_ref.dtype)


def feature_transform(x, w, *, out_dtype, tm=512):
    n, c_in = x.shape
    c_out = w.shape[1]
    tm = _pick_tile(n, tm)
    return pl.pallas_call(
        xw_kernel,
        out_shape=jax.ShapeDtypeStruct((n, c_out), out_dtype),
        grid_spec=pltpu.PrefetchScalarGridSpec(
            num_scalar_prefetch=0,
            grid=(n // tm,),
            in_specs=[
                pl.BlockSpec((tm, c_in), lambda i: (i, 0)),     # x row tile
                pl.BlockSpec((c_in, c_out), lambda i: (0, 0)),  # full W
            ],
            out_specs=pl.BlockSpec((tm, c_out), lambda i: (i, 0)),
        ),
        compiler_params=pltpu.CompilerParams(
            dimension_semantics=("parallel",),
        ),
    )(x, w)


# ---------------------------------------------------------------------------
# Stage 2:  out = adj @ XW  (+ fused ReLU), tiled (node-rows i, neighbors k)
# ---------------------------------------------------------------------------
def adj_xw_kernel(adj_ref, xw_ref, o_ref, *, apply_relu):
    k = pl.program_id(1)

    @pl.when(k == 0)
    def _():
        o_ref[...] = jnp.zeros_like(o_ref)

    # (tm, tk) bf16 @ (tk, c_out) bf16 -> f32, accumulated directly into the
    # resident f32 output block (no scratch buffer needed).
    o_ref[...] += jnp.dot(adj_ref[...], xw_ref[...],
                          preferred_element_type=jnp.float32)

    if apply_relu:
        @pl.when(k == pl.num_programs(1) - 1)
        def _():
            o_ref[...] = jnp.maximum(o_ref[...], 0.0)


def neighbor_aggregate(adj, xw, *, apply_relu, tm=512, tk=2048):
    n = adj.shape[0]
    c_out = xw.shape[1]
    tm = _pick_tile(n, tm)
    tk = _pick_tile(n, tk)
    k_steps = n // tk

    # Triple-buffer the adjacency DMA (the dominant stream) only when there is
    # more than one reduction step to overlap with.
    if k_steps >= 3:
        adj_spec = pl.BlockSpec((tm, tk), lambda i, k: (i, k),
                                pipeline_mode=pl.Buffered(3))
        adj_bufs = 3
    else:
        adj_spec = pl.BlockSpec((tm, tk), lambda i, k: (i, k))
        adj_bufs = 2

    # VMEM budget: buffered adj tiles + double-buffered XW tiles + double-
    # buffered f32 output tiles.  Defaults (tm=512, tk=2048, bf16) ~ 8 MiB,
    # comfortably inside v7x's 64 MiB as well as v5e/v6e's 128 MiB.
    est = (adj_bufs * tm * tk * adj.dtype.itemsize
           + 2 * tk * c_out * xw.dtype.itemsize
           + 2 * tm * c_out * 4)
    vmem_limit = int(min(max(2 * est, 32 * 1024 * 1024), 100 * 1024 * 1024))

    kernel = functools.partial(adj_xw_kernel, apply_relu=apply_relu)
    return pl.pallas_call(
        kernel,
        out_shape=jax.ShapeDtypeStruct((n, c_out), jnp.float32),
        grid_spec=pltpu.PrefetchScalarGridSpec(
            num_scalar_prefetch=0,
            grid=(n // tm, k_steps),
            in_specs=[
                adj_spec,                                        # adj tile
                pl.BlockSpec((tk, c_out), lambda i, k: (k, 0)),  # XW row tile
            ],
            out_specs=pl.BlockSpec((tm, c_out), lambda i, k: (i, 0)),
        ),
        compiler_params=pltpu.CompilerParams(
            # On v7x, keep n // tm even at real sizes so the parallel i-axis
            # splits across both TensorCores.
            dimension_semantics=("parallel", "arbitrary"),
            vmem_limit_bytes=vmem_limit,
        ),
    )(adj, xw)


def gcn_layer(adj, x, w, *, apply_relu, compute_dtype=jnp.bfloat16,
              tm=512, tk=2048):
    """One GCNConv layer:  adj @ x @ W  (+ optional fused ReLU)."""
    n = adj.shape[0]
    c_out = w.shape[1]
    assert n % LANE == 0, "node count must be a multiple of 128"

    # Pad output channels to a lane-dense multiple of 128 (zero columns);
    # sliced off again below.
    c_out_p = _round_up(c_out, LANE)
    if c_out_p != c_out:
        w = jnp.pad(w, ((0, 0), (0, c_out_p - c_out)))

    if adj.dtype != compute_dtype:
        adj = adj.astype(compute_dtype)

    # Hoisted feature transform: XW computed once, reused by every adj row tile.
    xw = feature_transform(x, w, out_dtype=compute_dtype, tm=tm)

    out = neighbor_aggregate(adj, xw, apply_relu=apply_relu, tm=tm, tk=tk)

    if c_out_p != c_out:
        out = out[:, :c_out]
    return out


def glorot(key, shape, dtype=jnp.float32):
    fan_in, fan_out = shape
    limit = (6.0 / (fan_in + fan_out)) ** 0.5
    return jax.random.uniform(key, shape, dtype, minval=-limit, maxval=limit)


def init_gcn_params(key, in_channels, hidden_channels, out_channels, num_layers):
    dims = [in_channels] + [hidden_channels] * (num_layers - 1) + [out_channels]
    params = []
    for i in range(num_layers):
        key, wk = jax.random.split(key)
        w = glorot(wk, (dims[i], dims[i + 1]))
        b = jnp.zeros((dims[i + 1],), jnp.float32)  # bias exists but unused in forward
        params.append((w, b))
    return params


def gcn_forward(x, adj, params, *, compute_dtype=jnp.bfloat16):
    # TODO(synk): F.dropout is stochastic in training mode; this implements
    # eval-mode semantics (dropout == identity).
    # Cast the dense adjacency once up front (HBM-bound operand).
    # TODO(synk): int8 (v5e/v6e) or fp8-e4m3 (v7x) adjacency with per-row
    # scales would cut the dominant HBM traffic another 2x.
    adj_c = adj.astype(compute_dtype)
    for w, _b in params[:-1]:
        x = gcn_layer(adj_c, x, w, apply_relu=True, compute_dtype=compute_dtype)
    w, _b = params[-1]
    return gcn_layer(adj_c, x, w, apply_relu=False, compute_dtype=compute_dtype)


def gcn_forward_ref(x, adj, params):
    for w, _b in params[:-1]:
        x = jnp.maximum(adj @ x @ w, 0.0)
    w, _b = params[-1]
    return adj @ x @ w


if __name__ == "__main__":
    key = jax.random.PRNGKey(0)
    N = 256            # number of nodes
    IN_C = 32          # input features
    HID_C = 128        # hidden channels
    OUT_C = 64         # output classes
    NUM_LAYERS = 3
    DROPOUT = 0.5      # unused at eval time

    k_x, k_a, k_p = jax.random.split(key, 3)
    x = jax.random.normal(k_x, (N, IN_C), jnp.float32)
    adj = jax.random.uniform(k_a, (N, N), jnp.float32)
    adj = adj / jnp.sum(adj, axis=1, keepdims=True)  # row-normalized dense adjacency

    params = init_gcn_params(k_p, IN_C, HID_C, OUT_C, NUM_LAYERS)

    out = gcn_forward(x, adj, params)
    out = jax.block_until_ready(out)

    ref = gcn_forward_ref(x, adj, params)  # full f32 reference
    assert out.shape == (N, OUT_C)
    # bf16 adjacency / XW with f32 accumulation: tolerance sized for the
    # intentional quantization (errors observed are ~1e-4 absolute here).
    assert jnp.allclose(out, ref, atol=2e-3, rtol=5e-2), "mismatch vs reference"

    print("KERNEL_OK")
</pallas_src>

<mosaic_0001>
module attributes {stable_mosaic.version = 11 : i64} {
  func.func @xw_kernel(%arg0: i32, %arg1: memref<256x32xf32, #tpu.memory_space<vmem>>, %arg2: memref<32x128xf32, #tpu.memory_space<vmem>>, %arg3: memref<256x128xbf16, #tpu.memory_space<vmem>>) attributes {dimension_semantics = [#tpu.dimension_semantics<parallel>], iteration_bounds = array<i64: 1>, scalar_prefetch = 0 : i64, scratch_operands = 0 : i64, tpu.core_type = #tpu.core_type<tc>, window_params = [{transform_indices = @transform_0, window_bounds = array<i64: 256, 32>}, {pipeline_mode = #tpu.pipeline_mode<synchronous>, transform_indices = @transform_1, window_bounds = array<i64: 32, 128>}, {transform_indices = @transform_2, window_bounds = array<i64: 256, 128>}]} {
    %c0 = arith.constant 0 : index
    %c0_0 = arith.constant 0 : index
    %0 = vector.load %arg1[%c0, %c0_0] : memref<256x32xf32, #tpu.memory_space<vmem>>, vector<256x32xf32>
    %c0_1 = arith.constant 0 : index
    %c0_2 = arith.constant 0 : index
    %1 = vector.load %arg2[%c0_1, %c0_2] : memref<32x128xf32, #tpu.memory_space<vmem>>, vector<32x128xf32>
    %cst = arith.constant dense<0.000000e+00> : vector<256x128xf32>
    %2 = tpu.matmul %0, %1, %cst {dimension_numbers = #tpu.dot_dimension_numbers<[1], [0], [0], [1], [0, 0, 1, 1], [], []>} : vector<256x32xf32>, vector<32x128xf32>, vector<256x128xf32> -> vector<256x128xf32>
    %3 = arith.truncf %2 : vector<256x128xf32> to vector<256x128xbf16>
    %c0_3 = arith.constant 0 : index
    %c0_4 = arith.constant 0 : index
    %4 = vector.load %arg3[%c0_3, %c0_4] : memref<256x128xbf16, #tpu.memory_space<vmem>>, vector<256x128xbf16>
    tpu.vector_store %arg3[%c0_3, %c0_4], %3 {strides = array<i32>} : memref<256x128xbf16, #tpu.memory_space<vmem>>, vector<256x128xbf16>,
    return
  }
  func.func @transform_0(%arg0: i32) -> (i32, i32) {
    %c0_i32 = arith.constant 0 : i32
    %c0_i32_0 = arith.constant 0 : i32
    return %arg0, %c0_i32 : i32, i32
  }
  func.func @transform_1(%arg0: i32) -> (i32, i32) {
    %c0_i32 = arith.constant 0 : i32
    %c0_i32_0 = arith.constant 0 : i32
    %c0_i32_1 = arith.constant 0 : i32
    return %c0_i32, %c0_i32_0 : i32, i32
  }
  func.func @transform_2(%arg0: i32) -> (i32, i32) {
    %c0_i32 = arith.constant 0 : i32
    %c0_i32_0 = arith.constant 0 : i32
    return %arg0, %c0_i32 : i32, i32
  }
}

</mosaic_0001>

<llo_original>
// kernel: tpu_custom_call.1
$region0: #{tpu_custom_call.1}
  #allocation0 [shape = 'u32[]', space=smem, size = 0x4, offset = 0x4, fixed_abs, tag = 'smem constant byte address 0x4 - core index']
  #allocation1 [shape = 'u32[144,128]{1,0:T(1,128)}', space=vmem, size = 0x12000, scoped, tag = 'internal scratch']
  %s0 = inlined_call_operand.vmem [shape: f32[256,32], index: 0, kind: input, shape index: {}]
  %s1 = inlined_call_operand.vmem [shape: f32[32,128], index: 1, kind: input, shape index: {}]
  %s2 = inlined_call_operand.hbm [shape: bf16[256,128], index: 2, kind: output, shape index: {}]
  %s3 = sld [smem:[#allocation0]]
  $region18: #{tpu_custom_call.1} parent=0
    _
  %s5 = ssub.s32 1, %s3
  %s6 = scalar_select 0, %s5, %s3
  $region1: #{tpu_custom_call.1} parent=0
    #allocation2 [shape = 'u8[65536]{0}', space=vmem, size = 0x10000, scoped, tag = 'output window, operand 0, single buffered']
    #allocation3 [shape = 's32[1]{0}', space=sflag, size = 0x4, scoped, tag = 'scoped memory for tpu_custom_call.1']
    %7 = vsyncpa [#allocation3], 0
    // Predicated region
    $region2: #{tpu_custom_call.1} parent=1 // pred_check
      _
    $region3: #{tpu_custom_call.1} parent=1 // pred_check_branch
      %9 = sbr.rel (0) target = $region5
    $region4: #{tpu_custom_call.1} parent=1 // pred_region
      _
    $region5: #{tpu_custom_call.1} parent=1 // pred_fallthru
      _
    // Predicated region
    $region6: #{tpu_custom_call.1} parent=1 // pred_check
      _
    $region7: #{tpu_custom_call.1} parent=1 // pred_check_branch
      %11 = sbr.rel (0) target = $region9
    $region8: #{tpu_custom_call.1} parent=1 // pred_region
      _
    $region9: #{tpu_custom_call.1} parent=1 // pred_fallthru
      _
    %v12 = vld [vmem:[%s0] sm:$0xff]
    %v13 = vld [vmem:[%s0 + $0x8] sm:$0xff]
    %v14 = vld [vmem:[%s0 + $0x10] sm:$0xff]
    %v15 = vld [vmem:[%s0 + $0x18] sm:$0xff]
    %v16 = vld [vmem:[%s0 + $0x20] sm:$0xff]
    %v17 = vld [vmem:[%s0 + $0x28] sm:$0xff]
    %v18 = vld [vmem:[%s0 + $0x30] sm:$0xff]
    %v19 = vld [vmem:[%s0 + $0x38] sm:$0xff]
    %v20 = vld [vmem:[%s0 + $0x40] sm:$0xff]
    %v21 = vld [vmem:[%s0 + $0x48] sm:$0xff]
    %v22 = vld [vmem:[%s0 + $0x50] sm:$0xff]
    %v23 = vld [vmem:[%s0 + $0x58] sm:$0xff]
    %v24 = vld [vmem:[%s0 + $0x60] sm:$0xff]
    %v25 = vld [vmem:[%s0 + $0x68] sm:$0xff]
    %v26 = vld [vmem:[%s0 + $0x70] sm:$0xff]
    %v27 = vld [vmem:[%s0 + $0x78] sm:$0xff]
    %v28 = vld [vmem:[%s0 + $0x80] sm:$0xff]
    %v29 = vld [vmem:[%s0 + $0x88] sm:$0xff]
    %v30 = vld [vmem:[%s0 + $0x90] sm:$0xff]
    %v31 = vld [vmem:[%s0 + $0x98] sm:$0xff]
    %v32 = vld [vmem:[%s0 + $0xa0] sm:$0xff]
    %v33 = vld [vmem:[%s0 + $0xa8] sm:$0xff]
    %v34 = vld [vmem:[%s0 + $0xb0] sm:$0xff]
    %v35 = vld [vmem:[%s0 + $0xb8] sm:$0xff]
    %v36 = vld [vmem:[%s0 + $0xc0] sm:$0xff]
    %v37 = vld [vmem:[%s0 + $0xc8] sm:$0xff]
    %v38 = vld [vmem:[%s0 + $0xd0] sm:$0xff]
    %v39 = vld [vmem:[%s0 + $0xd8] sm:$0xff]
    %v40 = vld [vmem:[%s0 + $0xe0] sm:$0xff]
    %v41 = vld [vmem:[%s0 + $0xe8] sm:$0xff]
    %v42 = vld [vmem:[%s0 + $0xf0] sm:$0xff]
    %v43 = vld [vmem:[%s0 + $0xf8] sm:$0xff]
    %v44 = vld [vmem:[%s1] sm:$0xff]
    %v45 = vld [vmem:[%s1 + $0x8] sm:$0xff]
    %v46 = vld [vmem:[%s1 + $0x10] sm:$0xff]
    %v47 = vld [vmem:[%s1 + $0x18] sm:$0xff]
    %vm48 = vcmask 261120
    %v50 = vsel %vm48, %v12, 0
    %v53 = vsel %vm48, %v13, 0
    %v56 = vsel %vm48, %v14, 0
    %v59 = vsel %vm48, %v15, 0
    %v62 = vsel %vm48, %v16, 0
    %v65 = vsel %vm48, %v17, 0
    %v68 = vsel %vm48, %v18, 0
    %v71 = vsel %vm48, %v19, 0
    %v74 = vsel %vm48, %v20, 0
    %v77 = vsel %vm48, %v21, 0
    %v80 = vsel %vm48, %v22, 0
    %v83 = vsel %vm48, %v23, 0
    %v86 = vsel %vm48, %v24, 0
    %v89 = vsel %vm48, %v25, 0
    %v92 = vsel %vm48, %v26, 0
    %v95 = vsel %vm48, %v27, 0
    %v98 = vsel %vm48, %v28, 0
    %v101 = vsel %vm48, %v29, 0
    %v104 = vsel %vm48, %v30, 0
    %v107 = vsel %vm48, %v31, 0
    %v110 = vsel %vm48, %v32, 0
    %v113 = vsel %vm48, %v33, 0
    %v116 = vsel %vm48, %v34, 0
    %v119 = vsel %vm48, %v35, 0
    %v122 = vsel %vm48, %v36, 0
    %v125 = vsel %vm48, %v37, 0
    %v128 = vsel %vm48, %v38, 0
    %v131 = vsel %vm48, %v39, 0
    %v134 = vsel %vm48, %v40, 0
    %v137 = vsel %vm48, %v41, 0
    %v140 = vsel %vm48, %v42, 0
    %v143 = vsel %vm48, %v43, 0
    %145 = vmatprep.subr.mxu0 0.0
    %146 = vmatpush1.msra.mxu0 0.0
    %147 = vmatprep.subr.mxu0 0.0
    %148 = vmatpush1.msra.mxu0 0.0
    %149 = vmatprep.subr.mxu0 0.0
    %150 = vmatpush1.msra.mxu0 0.0
    %151 = vmatprep.subr.mxu0 0.0
    %152 = vmatpush1.msra.mxu0 0.0
    %153 = vmatprep.subr.mxu0 0.0
    %154 = vmatpush1.msra.mxu0 0.0
    %155 = vmatprep.subr.mxu0 0.0
    %156 = vmatpush1.msra.mxu0 0.0
    %157 = vmatprep.subr.mxu0 0.0
    %158 = vmatpush1.msra.mxu0 0.0
    %159 = vmatprep.subr.mxu0 0.0
    %160 = vmatpush1.msra.mxu0 0.0
    %161 = vmatprep.subr.mxu0 0.0
    %162 = vmatpush1.msra.mxu0 0.0
    %163 = vmatprep.subr.mxu0 0.0
    %164 = vmatpush1.msra.mxu0 0.0
    %165 = vmatprep.subr.mxu0 0.0
    %166 = vmatpush1.msra.mxu0 0.0
    %167 = vmatprep.subr.mxu0 0.0
    %168 = vmatpush1.msra.mxu0 0.0
    %169 = vmatprep.subr.mxu0 0.0
    %170 = vmatpush1.msra.mxu0 %v47
    %171 = vmatprep.subr.mxu0 0.0
    %172 = vmatpush1.msra.mxu0 %v46
    %173 = vmatprep.subr.mxu0 0.0
    %174 = vmatpush1.msra.mxu0 %v45
    %175 = vmatprep.subr.mxu0 0.0
    %176 = vmatpush1.msra.mxu0 %v44
    %177 = vmatprep.subr.mxu0 0.0
    %178 = vmatpush2.msra.mxu0 0.0
    %179 = vmatprep.subr.mxu0 0.0
    %180 = vmatpush2.msra.mxu0 0.0
    %181 = vmatprep.subr.mxu0 0.0
    %182 = vmatpush2.msra.mxu0 0.0
    %183 = vmatprep.subr.mxu0 0.0
    %184 = vmatpush2.msra.mxu0 0.0
    %185 = vmatprep.subr.mxu0 0.0
    %186 = vmatpush2.msra.mxu0 0.0
    %187 = vmatprep.subr.mxu0 0.0
    %188 = vmatpush2.msra.mxu0 0.0
    %189 = vmatprep.subr.mxu0 0.0
    %190 = vmatpush2.msra.mxu0 0.0
    %191 = vmatprep.subr.mxu0 0.0
    %192 = vmatpush2.msra.mxu0 0.0
    %193 = vmatprep.subr.mxu0 0.0
    %194 = vmatpush2.msra.mxu0 0.0
    %195 = vmatprep.subr.mxu0 0.0
    %196 = vmatpush2.msra.mxu0 0.0
    %197 = vmatprep.subr.mxu0 0.0
    %198 = vmatpush2.msra.mxu0 0.0
    %199 = vmatprep.subr.mxu0 0.0
    %200 = vmatpush2.msra.mxu0 0.0
    %201 = vmatprep.subr.mxu0 0.0
    %202 = vmatpush2.msra.mxu0 0.0
    %203 = vmatprep.subr.mxu0 0.0
    %204 = vmatpush2.msra.mxu0 0.0
    %205 = vmatprep.subr.mxu0 0.0
    %206 = vmatpush2.msra.mxu0 0.0
    %207 = vmatprep.subr.mxu0 0.0
    %208 = vmatpush2.msra.mxu0 0.0
    %209 = vmatprep.mubr.f32.mxu0 0.0
    %210 = vmatmul.mubr.f32.gmra.mxu0 %v50
    %v211 = vpop.f32.mrf.mxu0
    %v212 = vadd.f32 0.0, %v211
    %v213 = vpop.f32.mrf.mxu0
    %214 = vmatprep.mubr.f32.mxu0 0.0
    %215 = vmatmul.mubr.f32.gmra.mxu0 %v53
    %v216 = vpop.f32.mrf.mxu0
    %v217 = vadd.f32 0.0, %v216
    %v218 = vpop.f32.mrf.mxu0
    %219 = vmatprep.mubr.f32.mxu0 0.0
    %220 = vmatmul.mubr.f32.gmra.mxu0 %v56
    %v221 = vpop.f32.mrf.mxu0
    %v222 = vadd.f32 0.0, %v221
    %v223 = vpop.f32.mrf.mxu0
    %224 = vmatprep.mubr.f32.mxu0 0.0
    %225 = vmatmul.mubr.f32.gmra.mxu0 %v59
    %v226 = vpop.f32.mrf.mxu0
    %v227 = vadd.f32 0.0, %v226
    %v228 = vpop.f32.mrf.mxu0
    %229 = vmatprep.mubr.f32.mxu0 0.0
    %230 = vmatmul.mubr.f32.gmra.mxu0 %v62
    %v231 = vpop.f32.mrf.mxu0
    %v232 = vadd.f32 0.0, %v231
    %v233 = vpop.f32.mrf.mxu0
    %234 = vmatprep.mubr.f32.mxu0 0.0
    %235 = vmatmul.mubr.f32.gmra.mxu0 %v65
    %v236 = vpop.f32.mrf.mxu0
    %v237 = vadd.f32 0.0, %v236
    %v238 = vpop.f32.mrf.mxu0
    %239 = vmatprep.mubr.f32.mxu0 0.0
    %240 = vmatmul.mubr.f32.gmra.mxu0 %v68
    %v241 = vpop.f32.mrf.mxu0
    %v242 = vadd.f32 0.0, %v241
    %v243 = vpop.f32.mrf.mxu0
    %244 = vmatprep.mubr.f32.mxu0 0.0
    %245 = vmatmul.mubr.f32.gmra.mxu0 %v71
    %v246 = vpop.f32.mrf.mxu0
    %v247 = vadd.f32 0.0, %v246
    %v248 = vpop.f32.mrf.mxu0
    %249 = vmatprep.mubr.f32.mxu0 0.0
    %250 = vmatmul.mubr.f32.gmra.mxu0 %v74
    %v251 = vpop.f32.mrf.mxu0
    %v252 = vadd.f32 0.0, %v251
    %v253 = vpop.f32.mrf.mxu0
    %254 = vmatprep.mubr.f32.mxu0 0.0
    %255 = vmatmul.mubr.f32.gmra.mxu0 %v77
    %v256 = vpop.f32.mrf.mxu0
    %v257 = vadd.f32 0.0, %v256
    %v258 = vpop.f32.mrf.mxu0
    %259 = vmatprep.mubr.f32.mxu0 0.0
    %260 = vmatmul.mubr.f32.gmra.mxu0 %v80
    %v261 = vpop.f32.mrf.mxu0
    %v262 = vadd.f32 0.0, %v261
    %v263 = vpop.f32.mrf.mxu0
    %264 = vmatprep.mubr.f32.mxu0 0.0
    %265 = vmatmul.mubr.f32.gmra.mxu0 %v83
    %v266 = vpop.f32.mrf.mxu0
    %v267 = vadd.f32 0.0, %v266
    %v268 = vpop.f32.mrf.mxu0
    %269 = vmatprep.mubr.f32.mxu0 0.0
    %270 = vmatmul.mubr.f32.gmra.mxu0 %v86
    %v271 = vpop.f32.mrf.mxu0
    %v272 = vadd.f32 0.0, %v271
    %v273 = vpop.f32.mrf.mxu0
    %274 = vmatprep.mubr.f32.mxu0 0.0
    %275 = vmatmul.mubr.f32.gmra.mxu0 %v89
    %v276 = vpop.f32.mrf.mxu0
    %v277 = vadd.f32 0.0, %v276
    %v278 = vpop.f32.mrf.mxu0
    %279 = vmatprep.mubr.f32.mxu0 0.0
    %280 = vmatmul.mubr.f32.gmra.mxu0 %v92
    %v281 = vpop.f32.mrf.mxu0
    %v282 = vadd.f32 0.0, %v281
    %v283 = vpop.f32.mrf.mxu0
    %284 = vmatprep.mubr.f32.mxu0 0.0
    %285 = vmatmul.mubr.f32.gmra.mxu0 %v95
    %v286 = vpop.f32.mrf.mxu0
    %v287 = vadd.f32 0.0, %v286
    %v288 = vpop.f32.mrf.mxu0
    %289 = vmatprep.mubr.f32.mxu0 0.0
    %290 = vmatmul.mubr.f32.gmra.mxu0 %v98
    %v291 = vpop.f32.mrf.mxu0
    %v292 = vadd.f32 0.0, %v291
    %v293 = vpop.f32.mrf.mxu0
    %294 = vmatprep.mubr.f32.mxu0 0.0
    %295 = vmatmul.mubr.f32.gmra.mxu0 %v101
    %v296 = vpop.f32.mrf.mxu0
    %v297 = vadd.f32 0.0, %v296
    %v298 = vpop.f32.mrf.mxu0
    %299 = vmatprep.mubr.f32.mxu0 0.0
    %300 = vmatmul.mubr.f32.gmra.mxu0 %v104
    %v301 = vpop.f32.mrf.mxu0
    %v302 = vadd.f32 0.0, %v301
    %v303 = vpop.f32.mrf.mxu0
    %304 = vmatprep.mubr.f32.mxu0 0.0
    %305 = vmatmul.mubr.f32.gmra.mxu0 %v107
    %v306 = vpop.f32.mrf.mxu0
    %v307 = vadd.f32 0.0, %v306
    %v308 = vpop.f32.mrf.mxu0
    %309 = vmatprep.mubr.f32.mxu0 0.0
    %310 = vmatmul.mubr.f32.gmra.mxu0 %v110
    %v311 = vpop.f32.mrf.mxu0
    %v312 = vadd.f32 0.0, %v311
    %v313 = vpop.f32.mrf.mxu0
    %314 = vmatprep.mubr.f32.mxu0 0.0
    %315 = vmatmul.mubr.f32.gmra.mxu0 %v113
    %v316 = vpop.f32.mrf.mxu0
    %v317 = vadd.f32 0.0, %v316
    %v318 = vpop.f32.mrf.mxu0
    %319 = vmatprep.mubr.f32.mxu0 0.0
    %320 = vmatmul.mubr.f32.gmra.mxu0 %v116
    %v321 = vpop.f32.mrf.mxu0
    %v322 = vadd.f32 0.0, %v321
    %v323 = vpop.f32.mrf.mxu0
    %324 = vmatprep.mubr.f32.mxu0 0.0
    %325 = vmatmul.mubr.f32.gmra.mxu0 %v119
    %v326 = vpop.f32.mrf.mxu0
    %v327 = vadd.f32 0.0, %v326
    %v328 = vpop.f32.mrf.mxu0
    %329 = vmatprep.mubr.f32.mxu0 0.0
    %330 = vmatmul.mubr.f32.gmra.mxu0 %v122
    %v331 = vpop.f32.mrf.mxu0
    %v332 = vadd.f32 0.0, %v331
    %v333 = vpop.f32.mrf.mxu0
    %334 = vmatprep.mubr.f32.mxu0 0.0
    %335 = vmatmul.mubr.f32.gmra.mxu0 %v125
    %v336 = vpop.f32.mrf.mxu0
    %v337 = vadd.f32 0.0, %v336
    %v338 = vpop.f32.mrf.mxu0
    %339 = vmatprep.mubr.f32.mxu0 0.0
    %340 = vmatmul.mubr.f32.gmra.mxu0 %v128
    %v341 = vpop.f32.mrf.mxu0
    %v342 = vadd.f32 0.0, %v341
    %v343 = vpop.f32.mrf.mxu0
    %344 = vmatprep.mubr.f32.mxu0 0.0
    %345 = vmatmul.mubr.f32.gmra.mxu0 %v131
    %v346 = vpop.f32.mrf.mxu0
    %v347 = vadd.f32 0.0, %v346
    %v348 = vpop.f32.mrf.mxu0
    %349 = vmatprep.mubr.f32.mxu0 0.0
    %350 = vmatmul.mubr.f32.gmra.mxu0 %v134
    %v351 = vpop.f32.mrf.mxu0
    %v352 = vadd.f32 0.0, %v351
    %v353 = vpop.f32.mrf.mxu0
    %354 = vmatprep.mubr.f32.mxu0 0.0
    %355 = vmatmul.mubr.f32.gmra.mxu0 %v137
    %v356 = vpop.f32.mrf.mxu0
    %v357 = vadd.f32 0.0, %v356
    %v358 = vpop.f32.mrf.mxu0
    %359 = vmatprep.mubr.f32.mxu0 0.0
    %360 = vmatmul.mubr.f32.gmra.mxu0 %v140
    %v361 = vpop.f32.mrf.mxu0
    %v362 = vadd.f32 0.0, %v361
    %v363 = vpop.f32.mrf.mxu0
    %364 = vmatprep.mubr.f32.mxu0 0.0
    %365 = vmatmul.mubr.f32.gmra.mxu0 %v143
    %v366 = vpop.f32.mrf.mxu0
    %v367 = vadd.f32 0.0, %v366
    %v368 = vpop.f32.mrf.mxu0
    %369 = vdwg.mxu0
    %v370 = vpack.c.bf16 %v217, %v212
    %v371 = vpack.c.bf16 %v227, %v222
    %v372 = vpack.c.bf16 %v237, %v232
    %v373 = vpack.c.bf16 %v247, %v242
    %v374 = vpack.c.bf16 %v257, %v252
    %v375 = vpack.c.bf16 %v267, %v262
    %v376 = vpack.c.bf16 %v277, %v272
    %v377 = vpack.c.bf16 %v287, %v282
    %v378 = vpack.c.bf16 %v297, %v292
    %v379 = vpack.c.bf16 %v307, %v302
    %v380 = vpack.c.bf16 %v317, %v312
    %v381 = vpack.c.bf16 %v327, %v322
    %v382 = vpack.c.bf16 %v337, %v332
    %v383 = vpack.c.bf16 %v347, %v342
    %v384 = vpack.c.bf16 %v357, %v352
    %v385 = vpack.c.bf16 %v367, %v362
    %v402 = vunpack.c.l.b16 %v370
    %v403 = vunpack.c.h.b16 %v370
    %v404 = vunpack.c.l.b16 %v371
    %v405 = vunpack.c.h.b16 %v371
    %v406 = vunpack.c.l.b16 %v372
    %v407 = vunpack.c.h.b16 %v372
    %v408 = vunpack.c.l.b16 %v373
    %v409 = vunpack.c.h.b16 %v373
    %v410 = vunpack.c.l.b16 %v374
    %v411 = vunpack.c.h.b16 %v374
    %v412 = vunpack.c.l.b16 %v375
    %v413 = vunpack.c.h.b16 %v375
    %v414 = vunpack.c.l.b16 %v376
    %v415 = vunpack.c.h.b16 %v376
    %v416 = vunpack.c.l.b16 %v377
    %v417 = vunpack.c.h.b16 %v377
    %v418 = vunpack.c.l.b16 %v378
    %v419 = vunpack.c.h.b16 %v378
    %v420 = vunpack.c.l.b16 %v379
    %v421 = vunpack.c.h.b16 %v379
    %v422 = vunpack.c.l.b16 %v380
    %v423 = vunpack.c.h.b16 %v380
    %v424 = vunpack.c.l.b16 %v381
    %v425 = vunpack.c.h.b16 %v381
    %v426 = vunpack.c.l.b16 %v382
    %v427 = vunpack.c.h.b16 %v382
    %v428 = vunpack.c.l.b16 %v383
    %v429 = vunpack.c.h.b16 %v383
    %v430 = vunpack.c.l.b16 %v384
    %v431 = vunpack.c.h.b16 %v384
    %v432 = vunpack.c.l.b16 %v385
    %v433 = vunpack.c.h.b16 %v385
    %v434 = vpack.c.b16 %v402, %v402
    %v435 = vpack.c.b16 %v403, %v403
    %v436 = vpack.c.b16 %v404, %v404
    %v437 = vpack.c.b16 %v405, %v405
    %v438 = vpack.c.b16 %v406, %v406
    %v439 = vpack.c.b16 %v407, %v407
    %v440 = vpack.c.b16 %v408, %v408
    %v441 = vpack.c.b16 %v409, %v409
    %v442 = vpack.c.b16 %v410, %v410
    %v443 = vpack.c.b16 %v411, %v411
    %v444 = vpack.c.b16 %v412, %v412
    %v445 = vpack.c.b16 %v413, %v413
    %v446 = vpack.c.b16 %v414, %v414
    %v447 = vpack.c.b16 %v415, %v415
    %v448 = vpack.c.b16 %v416, %v416
    %v449 = vpack.c.b16 %v417, %v417
    %v450 = vpack.c.b16 %v418, %v418
    %v451 = vpack.c.b16 %v419, %v419
    %v452 = vpack.c.b16 %v420, %v420
    %v453 = vpack.c.b16 %v421, %v421
    %v454 = vpack.c.b16 %v422, %v422
    %v455 = vpack.c.b16 %v423, %v423
    %v456 = vpack.c.b16 %v424, %v424
    %v457 = vpack.c.b16 %v425, %v425
    %v458 = vpack.c.b16 %v426, %v426
    %v459 = vpack.c.b16 %v427, %v427
    %v460 = vpack.c.b16 %v428, %v428
    %v461 = vpack.c.b16 %v429, %v429
    %v462 = vpack.c.b16 %v430, %v430
    %v463 = vpack.c.b16 %v431, %v431
    %v464 = vpack.c.b16 %v432, %v432
    %v465 = vpack.c.b16 %v433, %v433
    %498 = vst [vmem:[#allocation2] sm:$0xf] %v434
    %499 = vst [vmem:[#allocation2 + $0x4] sm:$0xf] %v435
    %500 = vst [vmem:[#allocation2 + $0x8] sm:$0xf] %v436
    %501 = vst [vmem:[#allocation2 + $0xc] sm:$0xf] %v437
    %502 = vst [vmem:[#allocation2 + $0x10] sm:$0xf] %v438
    %503 = vst [vmem:[#allocation2 + $0x14] sm:$0xf] %v439
    %504 = vst [vmem:[#allocation2 + $0x18] sm:$0xf] %v440
    %505 = vst [vmem:[#allocation2 + $0x1c] sm:$0xf] %v441
    %506 = vst [vmem:[#allocation2 + $0x20] sm:$0xf] %v442
    %507 = vst [vmem:[#allocation2 + $0x24] sm:$0xf] %v443
    %508 = vst [vmem:[#allocation2 + $0x28] sm:$0xf] %v444
    %509 = vst [vmem:[#allocation2 + $0x2c] sm:$0xf] %v445
    %510 = vst [vmem:[#allocation2 + $0x30] sm:$0xf] %v446
    %511 = vst [vmem:[#allocation2 + $0x34] sm:$0xf] %v447
    %512 = vst [vmem:[#allocation2 + $0x38] sm:$0xf] %v448
    %513 = vst [vmem:[#allocation2 + $0x3c] sm:$0xf] %v449
    %514 = vst [vmem:[#allocation2 + $0x40] sm:$0xf] %v450
    %515 = vst [vmem:[#allocation2 + $0x44] sm:$0xf] %v451
    %516 = vst [vmem:[#allocation2 + $0x48] sm:$0xf] %v452
    %517 = vst [vmem:[#allocation2 + $0x4c] sm:$0xf] %v453
    %518 = vst [vmem:[#allocation2 + $0x50] sm:$0xf] %v454
    %519 = vst [vmem:[#allocation2 + $0x54] sm:$0xf] %v455
    %520 = vst [vmem:[#allocation2 + $0x58] sm:$0xf] %v456
    %521 = vst [vmem:[#allocation2 + $0x5c] sm:$0xf] %v457
    %522 = vst [vmem:[#allocation2 + $0x60] sm:$0xf] %v458
    %523 = vst [vmem:[#allocation2 + $0x64] sm:$0xf] %v459
    %524 = vst [vmem:[#allocation2 + $0x68] sm:$0xf] %v460
    %525 = vst [vmem:[#allocation2 + $0x6c] sm:$0xf] %v461
    %526 = vst [vmem:[#allocation2 + $0x70] sm:$0xf] %v462
    %527 = vst [vmem:[#allocation2 + $0x74] sm:$0xf] %v463
    %528 = vst [vmem:[#allocation2 + $0x78] sm:$0xf] %v464
    %529 = vst [vmem:[#allocation2 + $0x7c] sm:$0xf] %v465
    // Predicated region
    $region10: #{tpu_custom_call.1} parent=1 // pred_check
      _
    $region11: #{tpu_custom_call.1} parent=1 // pred_check_branch
      %531 = sbr.rel (0) target = $region13
    $region12: #{tpu_custom_call.1} parent=1 // pred_region
      %s533 = ssub.s32 2048, 2048
      %534 = vsyncadd [#allocation3], %s533
      %s535 = sshll.u32 [#allocation2], 4
      %s536 = int_to_ptr.vmem [resolvable:$true] %s535
      %541 = dma.vmem_to_hbm [thread:$0]  %s536, 2048, %s2, [#allocation3], 64, 64, 4
    $region13: #{tpu_custom_call.1} parent=1 // pred_fallthru
      _
    // Predicated region
    $region14: #{tpu_custom_call.1} parent=1 // pred_check
      _
    $region15: #{tpu_custom_call.1} parent=1 // pred_check_branch
      %543 = sbr.rel (0) target = $region17
    $region16: #{tpu_custom_call.1} parent=1 // pred_region
      %544 = dma.done [#allocation3], 2048
    $region17: #{tpu_custom_call.1} parent=1 // pred_fallthru
      _
    %545 = vsyncpa [#allocation3], 1

</llo_original>
